<compile_context>
chip_gen: v7x
topology: tpu7x:2x2x1
jax: 0.10.0
libtpu: 0.0.40
codegen_flags: <defaults>
</compile_context>

<pallas_src>
import jax
import jax.numpy as jnp
from jax.experimental import pallas as pl
from jax.experimental.pallas import tpu as pltpu


def _zero_kernel(x_ref, o_ref):
    # Input is intentionally untouched (raw HBM ref, no DMA issued).
    del x_ref
    # Literal constant zero on the scalar (SMEM) path.
    o_ref[0, 0] = jnp.float32(0.0)


def zero_forward(x: jax.Array) -> jax.Array:
    """Pallas equivalent of Zero.forward: returns scalar float32 0.0."""
    out = pl.pallas_call(
        _zero_kernel,
        out_shape=jax.ShapeDtypeStruct((1, 1), jnp.float32),
        in_specs=[pl.BlockSpec(memory_space=pl.ANY)],  # raw HBM ref, never read
        out_specs=pl.BlockSpec(memory_space=pltpu.MemorySpace.SMEM),
    )(x)
    # Squeeze to a 0-d scalar, matching "return 0.0".
    return out.reshape(())


if __name__ == "__main__":
    key = jax.random.PRNGKey(0)
    # Small NCHW input consistent with a conv-style module: batch=2, C=4, H=W=16
    x = jax.random.normal(key, (2, 4, 16, 16), dtype=jnp.float32)

    result = zero_forward(x)
    jax.block_until_ready(result)

    assert result.shape == ()
    assert result.dtype == jnp.float32
    assert float(result) == 0.0

    print("KERNEL_OK")
</pallas_src>

<mosaic_0001>
module attributes {stable_mosaic.version = 11 : i64} {
  func.func @_zero_kernel(%arg0: memref<2x4x16x16xf32, #tpu.memory_space<any>>, %arg1: memref<1x1xf32, #tpu.memory_space<smem>>) attributes {dimension_semantics = [], scalar_prefetch = 0 : i64, scratch_operands = 0 : i64, tpu.core_type = #tpu.core_type<tc>} {
    %cst = arith.constant 0.000000e+00 : f32
    %c0 = arith.constant 0 : index
    %c0_0 = arith.constant 0 : index
    %0 = memref.load %arg1[%c0, %c0_0] : memref<1x1xf32, #tpu.memory_space<smem>>
    memref.store %cst, %arg1[%c0, %c0_0] : memref<1x1xf32, #tpu.memory_space<smem>>
    return
  }
}

</mosaic_0001>

<llo_original>
// kernel: tpu_custom_call.1
$region0: #{tpu_custom_call.1}
  #allocation0 [shape = 'u32[]', space=smem, size = 0x4, offset = 0x4, fixed_abs, tag = 'smem constant byte address 0x4 - core index']
  #allocation1 [shape = 'u32[144,128]{1,0:T(1,128)}', space=vmem, size = 0x12000, scoped, tag = 'internal scratch']
  %s0 = inlined_call_operand.hbm [shape: f32[2,4,16,16], index: 0, kind: input, shape index: {}]
  %s1 = inlined_call_operand.hbm [shape: f32[1,1], index: 1, kind: output, shape index: {}]
  %s2 = sld [smem:[#allocation0]]
  $region10: #{tpu_custom_call.1} parent=0
    _
  %s4 = ssub.s32 1, %s2
  %s5 = scalar_select 0, %s4, %s2
  $region1: #{tpu_custom_call.1} parent=0
    #allocation2 [shape = 'u8[512]{0}', space=smem, size = 0x200, scoped, tag = 'output window, operand 0, single buffered']
    #allocation3 [shape = 's32[1]{0}', space=sflag, size = 0x4, scoped, tag = 'scoped memory for tpu_custom_call.1']
    %6 = vsyncpa [#allocation3], 0
    %s7 = scalar_lea.smem [#allocation2], 0
    %8 = sst [smem:[%s7]] 0.0
    // Predicated region
    $region2: #{tpu_custom_call.1} parent=1 // pred_check
      _
    $region3: #{tpu_custom_call.1} parent=1 // pred_check_branch
      %10 = sbr.rel (0) target = $region5
    $region4: #{tpu_custom_call.1} parent=1 // pred_region
      %s12 = ssub.s32 16, 16
      %13 = vsyncadd [#allocation3], %s12
      %16 = dma.smem_to_hbm [#allocation2], 16, %s1, [#allocation3]
    $region5: #{tpu_custom_call.1} parent=1 // pred_fallthru
      _
    // Predicated region
    $region6: #{tpu_custom_call.1} parent=1 // pred_check
      _
    $region7: #{tpu_custom_call.1} parent=1 // pred_check_branch
      %18 = sbr.rel (0) target = $region9
    $region8: #{tpu_custom_call.1} parent=1 // pred_region
      %19 = dma.done [#allocation3], 16
    $region9: #{tpu_custom_call.1} parent=1 // pred_fallthru
      _
    %20 = sfence
    %21 = vsyncpa [#allocation3], 1

</llo_original>
